<compile_context>
chip_gen: v5e
topology: v5e:2x2
jax: 0.10.0
libtpu: 0.0.40
codegen_flags: <defaults>
</compile_context>

<pallas_src>
import jax
import jax.numpy as jnp
from jax.experimental import pallas as pl
from jax.experimental.pallas import tpu as pltpu


def _round_up(v, m):
    return ((v + m - 1) // m) * m


def _pad_lane(d, prefer_256=False):
    """Lane padding target: 128-multiples; optionally bump odd 128-multiples
    (>256) up to 256-multiples for the 256-wide v6e/v7x MXU.  Never inflates
    genuinely small dims."""
    p = _round_up(d, 128)
    if prefer_256 and p > 256 and p % 256 != 0:
        p = _round_up(d, 256)
    return p


def _pick_batch_tile(B, N, target_rows):
    """Batch elements per grid step (TB_B); TB_B * N rows form one matmul M dim.

    Guarantees TB_B % 8 == 0 whenever more than one grid step is used (sublane
    rule for the x / output blocks).  Non-divisible batch sizes are handled by
    zero-padding B in the wrapper, never by a single huge fallback tile."""
    if B * N <= target_rows:
        return B                                 # single tile: block == full array
    tb = max(((target_rows // N) // 8) * 8, 8)
    if tb >= B:
        return B                                 # single tile, no batch padding
    return tb


def _epinet_kernel(x_ref, bz_ref, w1x_ref, w2_ref, b2_ref, w3_ref,
                   zrep_ref, sel_ref, o_ref):
    """One fused row tile: TB = TB_B * num_Z rows of the flattened activations
    -> one contiguous (TB_B, Op) output block."""
    cdt = w2_ref.dtype                    # MXU input dtype (bf16 default), f32 acc
    N, Hp = bz_ref.shape
    TB = x_ref.shape[0]
    TB_B = TB // N
    ROp = zrep_ref.shape[1]

    # layer 1: x @ w1_x ; the z-dependent part (z @ w1_z + b1) is the small
    # (N, Hp) bz block, broadcast over the TB_B batch elements of the tile.
    h1 = jnp.dot(x_ref[...], w1x_ref[...],
                 preferred_element_type=jnp.float32)                  # (TB, Hp)
    h1 = jnp.maximum(h1.reshape(TB_B, N, Hp) + bz_ref[...][None], 0.0)
    h1 = h1.reshape(TB, Hp)

    # layer 2
    h2 = jnp.maximum(
        jnp.dot(h1.astype(cdt), w2_ref[...],
                preferred_element_type=jnp.float32) + b2_ref[...], 0.0)  # (TB, Hp)

    # layer 3 (b3 folded into a wrapper-side length-O constant)
    out3 = jnp.dot(h2.astype(cdt), w3_ref[...],
                   preferred_element_type=jnp.float32)                 # (TB, ROp)

    # z-contraction + mean over num_Z:
    #   zrep[n, r*O + o] = z[n, r] * lmbda / num_Z   (scale folded in)
    # broadcast-multiply over the batch axis, sublane-sum over num_Z (VPU/XLU,
    # no pooling matmul), then a tiny selection matmul collapses r -> O lanes.
    weighted = out3.reshape(TB_B, N, ROp) * zrep_ref[...][None]        # (TB_B,N,ROp)
    pooled = jnp.sum(weighted, axis=1)                                 # (TB_B, ROp)
    o_ref[...] = jnp.dot(pooled.astype(cdt), sel_ref[...],
                         preferred_element_type=jnp.float32)           # (TB_B, Op)


def epinet_forward(x, z, params, *, lmbda=1.0, compute_dtype=jnp.bfloat16,
                   target_rows=1024, prefer_256_lanes=False,
                   vmem_limit_bytes=None):
    """x: (B, N, hid_rep), z: (N, R) -> (B, O) f32  (return_full_z=False path).

    target_rows: rows (batch*num_Z) per grid step; ~1024 fits comfortably in the
    v6e/v7x scoped VMEM defaults; lower it (or set vmem_limit_bytes) on v5e when
    hid_rep / hidden are large.  prefer_256_lanes: pad odd 128-multiples of the
    hidden / R*O lane dims to 256-multiples for the 256-wide v6e/v7x MXU."""
    w1, b1, w2, b2, w3, b3 = [p.astype(jnp.float32) for p in params]
    B, N, hid_rep = x.shape
    assert N == z.shape[0], "wrong z dimension"
    R = z.shape[1]
    H = w1.shape[1]
    RO = w3.shape[1]
    O = RO // R
    assert w1.shape[0] == hid_rep + R, "w1 must be (hid_rep + ref_size, hidden)"

    x = jax.lax.stop_gradient(x)          # mirrors x.detach()
    x32 = x.astype(jnp.float32)
    z32 = z.astype(jnp.float32)

    # ---- batch-invariant precompute: x_tilda = cat(x, z) is never built ------
    w1_x, w1_z = w1[:hid_rep], w1[hid_rep:]
    bz = z32 @ w1_z + b1                                    # (N, H) f32, exact

    # b3's contribution after the (r,o) contraction + mean over num_Z is a
    # constant length-O vector -> added in the wrapper, dropped from the kernel.
    b3_out = (z32.sum(axis=0) @ b3.reshape(R, O)) * (float(lmbda) / N)   # (O,)

    # Lane-dense zero padding (semantics preserving: padded weight rows/cols,
    # bias entries and zrep/sel pad entries are zero; ReLU(0) = 0).
    Hp = _pad_lane(H, prefer_256_lanes)
    ROp = _pad_lane(RO, prefer_256_lanes)
    Op = _round_up(O, 128)                # lane-dense output block -> unmasked vst
    w1x_p = jnp.pad(w1_x, ((0, 0), (0, Hp - H)))
    bz_p = jnp.pad(bz, ((0, 0), (0, Hp - H)))
    w2_p = jnp.pad(w2, ((0, Hp - H), (0, Hp - H)))
    b2_p = jnp.pad(b2, (0, Hp - H))
    w3_p = jnp.pad(w3, ((0, Hp - H), (0, ROp - RO)))

    # z replication with lmbda / num_Z folded in + the (RO, O) selection matrix
    # so the (r, o) contraction runs on the MXU.
    zrep = jnp.repeat(z32, O, axis=1) * (float(lmbda) / N)             # (N, RO)
    zrep_p = jnp.pad(zrep, ((0, 0), (0, ROp - RO)))
    sel = jnp.tile(jnp.eye(O, dtype=jnp.float32), (R, 1))              # (RO, O)
    sel_p = jnp.pad(sel, ((0, ROp - RO), (0, Op - O)))

    # ---- fused row-tile layout ------------------------------------------------
    TB_B = _pick_batch_tile(B, N, target_rows)      # batch elems per grid step
    num_tiles = -(-B // TB_B)
    B_pad = num_tiles * TB_B
    TB = TB_B * N                                   # matmul M rows per step

    x2 = x32.reshape(B * N, hid_rep)
    if B_pad != B:
        # zero-pad extra batch rows; their outputs are sliced off below.
        x2 = jnp.pad(x2, ((0, (B_pad - B) * N), (0, 0)))
    x2 = x2.astype(compute_dtype)                   # K dim (hid_rep) left unpadded

    w1x_c = w1x_p.astype(compute_dtype)
    w2_c = w2_p.astype(compute_dtype)
    w3_c = w3_p.astype(compute_dtype)
    sel_c = sel_p.astype(compute_dtype)             # exact 0/1 values in bf16
    b2_2d = b2_p.reshape(1, Hp)                     # f32 bias add on the VPU

    cp_kwargs = dict(dimension_semantics=("parallel",))
    if vmem_limit_bytes is not None:
        cp_kwargs["vmem_limit_bytes"] = vmem_limit_bytes
    compiler_params = pltpu.CompilerParams(**cp_kwargs)

    const = lambda i: (0, 0)

    def _call(const_pipeline_mode):
        def cspec(shape):
            if const_pipeline_mode is None:
                return pl.BlockSpec(shape, const)
            return pl.BlockSpec(shape, const, pipeline_mode=const_pipeline_mode)

        return pl.pallas_call(
            _epinet_kernel,
            out_shape=jax.ShapeDtypeStruct((B_pad, Op), jnp.float32),
            grid_spec=pltpu.PrefetchScalarGridSpec(
                num_scalar_prefetch=0,
                grid=(num_tiles,),
                in_specs=[
                    pl.BlockSpec((TB, hid_rep), lambda i: (i, 0)),   # x row tile
                    cspec((N, Hp)),            # bz = z @ w1_z + b1
                    cspec((hid_rep, Hp)),      # w1_x
                    cspec((Hp, Hp)),           # w2
                    cspec((1, Hp)),            # b2
                    cspec((Hp, ROp)),          # w3
                    cspec((N, ROp)),           # zrep (lmbda/num_Z folded in)
                    cspec((ROp, Op)),          # (r, o) selection matrix
                ],
                out_specs=pl.BlockSpec((TB_B, Op), lambda i: (i, 0)),
            ),
            compiler_params=compiler_params,
        )(x2, bz_p, w1x_c, w2_c, b2_2d, w3_c, zrep_p, sel_c)

    try:
        # Grid-invariant blocks only need one pipeline buffer; halves their VMEM.
        out_pad = _call(pl.Buffered(1))
    except Exception:
        # Fallback if this Pallas build rejects pipeline_mode / Buffered(1).
        out_pad = _call(None)

    out = out_pad[:B, :O] + b3_out[None, :]
    # TODO(synk): the return_full_z=True branch (per-z outputs, no mean over
    # num_Z) is not exposed; it would emit `weighted @ sel` reshaped to (B, N, O)
    # and skip the sublane sum.
    return out


def init_epinet_params(key, hid_rep_size, ref_size, hidden_size, output_size, gain):
    """Xavier-uniform weights (with gain), zero biases. Weights stored (in, out)."""
    def xavier(k, fan_in, fan_out):
        a = gain * jnp.sqrt(6.0 / (fan_in + fan_out))
        return jax.random.uniform(k, (fan_in, fan_out), jnp.float32, -a, a)

    Fin = hid_rep_size + ref_size
    k1, k2, k3 = jax.random.split(key, 3)
    w1 = xavier(k1, Fin, hidden_size)
    b1 = jnp.zeros((hidden_size,), jnp.float32)
    w2 = xavier(k2, hidden_size, hidden_size)
    b2 = jnp.zeros((hidden_size,), jnp.float32)
    w3 = xavier(k3, hidden_size, ref_size * output_size)
    b3 = jnp.zeros((ref_size * output_size,), jnp.float32)
    return (w1, b1, w2, b2, w3, b3)


def epinet_reference(x, z, params, *, lmbda=1.0):
    """Pure-JAX mirror of the PyTorch forward (return_full_z=False)."""
    w1, b1, w2, b2, w3, b3 = params
    B, N, _ = x.shape
    R = z.shape[1]
    O = w3.shape[1] // R
    z_b = jnp.broadcast_to(z[None], (B, N, R))
    xt = jnp.concatenate([x, z_b], axis=2)
    h = jax.nn.relu(xt @ w1 + b1)
    h = jax.nn.relu(h @ w2 + b2)
    h = (h @ w3 + b3).reshape(B, N, R, O)
    out = jnp.einsum("bnro,bnr->bno", h, z_b)     # == transpose(2,3) @ z[...,None]
    out = jnp.mean(out, axis=1)                   # (B, O)
    return lmbda * out.reshape(-1, O)


if __name__ == "__main__":
    # Small, module-consistent shapes.
    batch = 2
    num_Z = 8
    hid_rep_size = 32
    ref_size = 16
    hidden_size = 32
    output_size = 4
    gain = 1.0
    lmbda = 0.5

    key = jax.random.PRNGKey(0)
    kx, kz, kp = jax.random.split(key, 3)

    x = jax.random.normal(kx, (batch, num_Z, hid_rep_size), jnp.float32)
    z = jax.random.normal(kz, (num_Z, ref_size), jnp.float32)
    params = init_epinet_params(kp, hid_rep_size, ref_size, hidden_size,
                                output_size, gain)

    # Bigger batch that is NOT a multiple of the tile -> exercises batch padding
    # and the multi-tile (num_tiles >= 2) path.
    batch_big = 10
    x_big = jax.random.normal(jax.random.PRNGKey(1),
                              (batch_big, num_Z, hid_rep_size), jnp.float32)

    with jax.default_matmul_precision("highest"):
        ref = epinet_reference(x, z, params, lmbda=lmbda)
        ref_big = epinet_reference(x_big, z, params, lmbda=lmbda)

    # f32 MXU-input path: structural check (padding / indexing / pooling / b3 fold).
    out_f32 = jax.block_until_ready(
        epinet_forward(x, z, params, lmbda=lmbda, compute_dtype=jnp.float32))
    assert out_f32.shape == (batch, output_size), out_f32.shape
    assert jnp.allclose(out_f32, ref, atol=1e-2, rtol=1e-2), (out_f32, ref)

    # bf16 MXU-input path (default fast path): relaxed tolerance.
    out_bf16 = jax.block_until_ready(epinet_forward(x, z, params, lmbda=lmbda))
    assert out_bf16.shape == (batch, output_size), out_bf16.shape
    assert jnp.allclose(out_bf16, ref, atol=5e-2, rtol=5e-2), (out_bf16, ref)

    # Multi-tile path: small target_rows forces TB_B=8, num_tiles=2, batch padded.
    out_big = jax.block_until_ready(
        epinet_forward(x_big, z, params, lmbda=lmbda,
                       compute_dtype=jnp.float32, target_rows=32))
    assert out_big.shape == (batch_big, output_size), out_big.shape
    assert jnp.allclose(out_big, ref_big, atol=1e-2, rtol=1e-2), (out_big, ref_big)

    print("KERNEL_OK")
</pallas_src>

<mosaic_0001>
module attributes {stable_mosaic.version = 11 : i64} {
  func.func @_epinet_kernel(%arg0: i32, %arg1: memref<16x32xf32, #tpu.memory_space<vmem>>, %arg2: memref<8x128xf32, #tpu.memory_space<vmem>>, %arg3: memref<32x128xf32, #tpu.memory_space<vmem>>, %arg4: memref<128x128xf32, #tpu.memory_space<vmem>>, %arg5: memref<1x128xf32, #tpu.memory_space<vmem>>, %arg6: memref<128x128xf32, #tpu.memory_space<vmem>>, %arg7: memref<8x128xf32, #tpu.memory_space<vmem>>, %arg8: memref<128x128xf32, #tpu.memory_space<vmem>>, %arg9: memref<2x128xf32, #tpu.memory_space<vmem>>) attributes {dimension_semantics = [#tpu.dimension_semantics<parallel>], iteration_bounds = array<i64: 1>, scalar_prefetch = 0 : i64, scratch_operands = 0 : i64, tpu.core_type = #tpu.core_type<tc>, window_params = [{transform_indices = @transform_0, window_bounds = array<i64: 16, 32>}, {pipeline_mode = #tpu.pipeline_mode<synchronous>, transform_indices = @transform_1, window_bounds = array<i64: 8, 128>}, {pipeline_mode = #tpu.pipeline_mode<synchronous>, transform_indices = @transform_2, window_bounds = array<i64: 32, 128>}, {pipeline_mode = #tpu.pipeline_mode<synchronous>, transform_indices = @transform_3, window_bounds = array<i64: 128, 128>}, {pipeline_mode = #tpu.pipeline_mode<synchronous>, transform_indices = @transform_4, window_bounds = array<i64: 1, 128>}, {pipeline_mode = #tpu.pipeline_mode<synchronous>, transform_indices = @transform_5, window_bounds = array<i64: 128, 128>}, {pipeline_mode = #tpu.pipeline_mode<synchronous>, transform_indices = @transform_6, window_bounds = array<i64: 8, 128>}, {pipeline_mode = #tpu.pipeline_mode<synchronous>, transform_indices = @transform_7, window_bounds = array<i64: 128, 128>}, {transform_indices = @transform_8, window_bounds = array<i64: 2, 128>}]} {
    %c0 = arith.constant 0 : index
    %c0_0 = arith.constant 0 : index
    %0 = vector.load %arg1[%c0, %c0_0] : memref<16x32xf32, #tpu.memory_space<vmem>>, vector<16x32xf32>
    %c0_1 = arith.constant 0 : index
    %c0_2 = arith.constant 0 : index
    %1 = vector.load %arg3[%c0_1, %c0_2] : memref<32x128xf32, #tpu.memory_space<vmem>>, vector<32x128xf32>
    %cst = arith.constant dense<0.000000e+00> : vector<16x128xf32>
    %2 = tpu.matmul %0, %1, %cst {dimension_numbers = #tpu.dot_dimension_numbers<[1], [0], [0], [1], [0, 0, 1, 1], [], []>} : vector<16x32xf32>, vector<32x128xf32>, vector<16x128xf32> -> vector<16x128xf32>
    %3 = vector.shape_cast %2 : vector<16x128xf32> to vector<2x8x128xf32>
    %c0_3 = arith.constant 0 : index
    %c0_4 = arith.constant 0 : index
    %4 = vector.load %arg2[%c0_3, %c0_4] : memref<8x128xf32, #tpu.memory_space<vmem>>, vector<8x128xf32>
    %5 = vector.shape_cast %4 : vector<8x128xf32> to vector<1x8x128xf32>
    %6 = vector.broadcast %5 : vector<1x8x128xf32> to vector<2x8x128xf32>
    %7 = arith.addf %3, %6 : vector<2x8x128xf32>
    %cst_5 = arith.constant 0.000000e+00 : f32
    %8 = vector.broadcast %cst_5 : f32 to vector<2x8x128xf32>
    %9 = arith.maximumf %7, %8 : vector<2x8x128xf32>
    %10 = vector.shape_cast %9 : vector<2x8x128xf32> to vector<16x128xf32>
    %c0_6 = arith.constant 0 : index
    %c0_7 = arith.constant 0 : index
    %11 = vector.load %arg4[%c0_6, %c0_7] : memref<128x128xf32, #tpu.memory_space<vmem>>, vector<128x128xf32>
    %cst_8 = arith.constant dense<0.000000e+00> : vector<16x128xf32>
    %12 = tpu.matmul %10, %11, %cst_8 {dimension_numbers = #tpu.dot_dimension_numbers<[1], [0], [0], [1], [0, 0, 1, 1], [], []>} : vector<16x128xf32>, vector<128x128xf32>, vector<16x128xf32> -> vector<16x128xf32>
    %c0_9 = arith.constant 0 : index
    %c0_10 = arith.constant 0 : index
    %13 = vector.load %arg5[%c0_9, %c0_10] : memref<1x128xf32, #tpu.memory_space<vmem>>, vector<1x128xf32>
    %14 = vector.broadcast %13 : vector<1x128xf32> to vector<16x128xf32>
    %15 = arith.addf %12, %14 : vector<16x128xf32>
    %cst_11 = arith.constant 0.000000e+00 : f32
    %16 = vector.broadcast %cst_11 : f32 to vector<16x128xf32>
    %17 = arith.maximumf %15, %16 : vector<16x128xf32>
    %c0_12 = arith.constant 0 : index
    %c0_13 = arith.constant 0 : index
    %18 = vector.load %arg6[%c0_12, %c0_13] : memref<128x128xf32, #tpu.memory_space<vmem>>, vector<128x128xf32>
    %cst_14 = arith.constant dense<0.000000e+00> : vector<16x128xf32>
    %19 = tpu.matmul %17, %18, %cst_14 {dimension_numbers = #tpu.dot_dimension_numbers<[1], [0], [0], [1], [0, 0, 1, 1], [], []>} : vector<16x128xf32>, vector<128x128xf32>, vector<16x128xf32> -> vector<16x128xf32>
    %20 = vector.shape_cast %19 : vector<16x128xf32> to vector<2x8x128xf32>
    %c0_15 = arith.constant 0 : index
    %c0_16 = arith.constant 0 : index
    %21 = vector.load %arg7[%c0_15, %c0_16] : memref<8x128xf32, #tpu.memory_space<vmem>>, vector<8x128xf32>
    %22 = vector.shape_cast %21 : vector<8x128xf32> to vector<1x8x128xf32>
    %23 = vector.broadcast %22 : vector<1x8x128xf32> to vector<2x8x128xf32>
    %24 = arith.mulf %20, %23 : vector<2x8x128xf32>
    %cst_17 = arith.constant dense<0.000000e+00> : vector<2x128xf32>
    %25 = vector.multi_reduction <add>, %24, %cst_17 [1] : vector<2x8x128xf32> to vector<2x128xf32>
    %c0_18 = arith.constant 0 : index
    %c0_19 = arith.constant 0 : index
    %26 = vector.load %arg8[%c0_18, %c0_19] : memref<128x128xf32, #tpu.memory_space<vmem>>, vector<128x128xf32>
    %cst_20 = arith.constant dense<0.000000e+00> : vector<2x128xf32>
    %27 = tpu.matmul %25, %26, %cst_20 {dimension_numbers = #tpu.dot_dimension_numbers<[1], [0], [0], [1], [0, 0, 1, 1], [], []>} : vector<2x128xf32>, vector<128x128xf32>, vector<2x128xf32> -> vector<2x128xf32>
    %c0_21 = arith.constant 0 : index
    %c0_22 = arith.constant 0 : index
    %28 = vector.load %arg9[%c0_21, %c0_22] : memref<2x128xf32, #tpu.memory_space<vmem>>, vector<2x128xf32>
    tpu.vector_store %arg9[%c0_21, %c0_22], %27 {strides = array<i32>} : memref<2x128xf32, #tpu.memory_space<vmem>>, vector<2x128xf32>,
    return
  }
  func.func @transform_0(%arg0: i32) -> (i32, i32) {
    %c0_i32 = arith.constant 0 : i32
    %c0_i32_0 = arith.constant 0 : i32
    return %arg0, %c0_i32 : i32, i32
  }
  func.func @transform_1(%arg0: i32) -> (i32, i32) {
    %c0_i32 = arith.constant 0 : i32
    %c0_i32_0 = arith.constant 0 : i32
    %c0_i32_1 = arith.constant 0 : i32
    return %c0_i32, %c0_i32_0 : i32, i32
  }
  func.func @transform_2(%arg0: i32) -> (i32, i32) {
    %c0_i32 = arith.constant 0 : i32
    %c0_i32_0 = arith.constant 0 : i32
    %c0_i32_1 = arith.constant 0 : i32
    return %c0_i32, %c0_i32_0 : i32, i32
  }
  func.func @transform_3(%arg0: i32) -> (i32, i32) {
    %c0_i32 = arith.constant 0 : i32
    %c0_i32_0 = arith.constant 0 : i32
    %c0_i32_1 = arith.constant 0 : i32
    return %c0_i32, %c0_i32_0 : i32, i32
  }
  func.func @transform_4(%arg0: i32) -> (i32, i32) {
    %c0_i32 = arith.constant 0 : i32
    %c0_i32_0 = arith.constant 0 : i32
    %c0_i32_1 = arith.constant 0 : i32
    return %c0_i32, %c0_i32_0 : i32, i32
  }
  func.func @transform_5(%arg0: i32) -> (i32, i32) {
    %c0_i32 = arith.constant 0 : i32
    %c0_i32_0 = arith.constant 0 : i32
    %c0_i32_1 = arith.constant 0 : i32
    return %c0_i32, %c0_i32_0 : i32, i32
  }
  func.func @transform_6(%arg0: i32) -> (i32, i32) {
    %c0_i32 = arith.constant 0 : i32
    %c0_i32_0 = arith.constant 0 : i32
    %c0_i32_1 = arith.constant 0 : i32
    return %c0_i32, %c0_i32_0 : i32, i32
  }
  func.func @transform_7(%arg0: i32) -> (i32, i32) {
    %c0_i32 = arith.constant 0 : i32
    %c0_i32_0 = arith.constant 0 : i32
    %c0_i32_1 = arith.constant 0 : i32
    return %c0_i32, %c0_i32_0 : i32, i32
  }
  func.func @transform_8(%arg0: i32) -> (i32, i32) {
    %c0_i32 = arith.constant 0 : i32
    %c0_i32_0 = arith.constant 0 : i32
    return %arg0, %c0_i32 : i32, i32
  }
}

module attributes {stable_mosaic.version = 11 : i64} {
  func.func @_epinet_kernel(%arg0: i32, %arg1: memref<16x32xf32, #tpu.memory_space<vmem>>, %arg2: memref<8x128xf32, #tpu.memory_space<vmem>>, %arg3: memref<32x128xf32, #tpu.memory_space<vmem>>, %arg4: memref<128x128xf32, #tpu.memory_space<vmem>>, %arg5: memref<1x128xf32, #tpu.memory_space<vmem>>, %arg6: memref<128x128xf32, #tpu.memory_space<vmem>>, %arg7: memref<8x128xf32, #tpu.memory_space<vmem>>, %arg8: memref<128x128xf32, #tpu.memory_space<vmem>>, %arg9: memref<2x128xf32, #tpu.memory_space<vmem>>) attributes {dimension_semantics = [#tpu.dimension_semantics<parallel>], iteration_bounds = array<i64: 1>, scalar_prefetch = 0 : i64, scratch_operands = 0 : i64, tpu.core_type = #tpu.core_type<tc>, window_params = [{transform_indices = @transform_0, window_bounds = array<i64: 16, 32>}, {pipeline_mode = #tpu.pipeline_mode<synchronous>, transform_indices = @transform_1, window_bounds = array<i64: 8, 128>}, {pipeline_mode = #tpu.pipeline_mode<synchronous>, transform_indices = @transform_2, window_bounds = array<i64: 32, 128>}, {pipeline_mode = #tpu.pipeline_mode<synchronous>, transform_indices = @transform_3, window_bounds = array<i64: 128, 128>}, {pipeline_mode = #tpu.pipeline_mode<synchronous>, transform_indices = @transform_4, window_bounds = array<i64: 1, 128>}, {pipeline_mode = #tpu.pipeline_mode<synchronous>, transform_indices = @transform_5, window_bounds = array<i64: 128, 128>}, {pipeline_mode = #tpu.pipeline_mode<synchronous>, transform_indices = @transform_6, window_bounds = array<i64: 8, 128>}, {pipeline_mode = #tpu.pipeline_mode<synchronous>, transform_indices = @transform_7, window_bounds = array<i64: 128, 128>}, {transform_indices = @transform_8, window_bounds = array<i64: 2, 128>}]} {
    %c0 = arith.constant 0 : index
    %c0_0 = arith.constant 0 : index
    %0 = vector.load %arg1[%c0, %c0_0] : memref<16x32xf32, #tpu.memory_space<vmem>>, vector<16x32xf32>
    %c0_1 = arith.constant 0 : index
    %c0_2 = arith.constant 0 : index
    %1 = vector.load %arg3[%c0_1, %c0_2] : memref<32x128xf32, #tpu.memory_space<vmem>>, vector<32x128xf32>
    %cst = arith.constant dense<0.000000e+00> : vector<16x128xf32>
    %2 = tpu.matmul %0, %1, %cst {dimension_numbers = #tpu.dot_dimension_numbers<[1], [0], [0], [1], [0, 0, 1, 1], [], []>} : vector<16x32xf32>, vector<32x128xf32>, vector<16x128xf32> -> vector<16x128xf32>
    %3 = vector.shape_cast %2 : vector<16x128xf32> to vector<2x8x128xf32>
    %c0_3 = arith.constant 0 : index
    %c0_4 = arith.constant 0 : index
    %4 = vector.load %arg2[%c0_3, %c0_4] : memref<8x128xf32, #tpu.memory_space<vmem>>, vector<8x128xf32>
    %5 = vector.shape_cast %4 : vector<8x128xf32> to vector<1x8x128xf32>
    %6 = vector.broadcast %5 : vector<1x8x128xf32> to vector<2x8x128xf32>
    %7 = arith.addf %3, %6 : vector<2x8x128xf32>
    %cst_5 = arith.constant 0.000000e+00 : f32
    %8 = vector.broadcast %cst_5 : f32 to vector<2x8x128xf32>
    %9 = arith.maximumf %7, %8 : vector<2x8x128xf32>
    %10 = vector.shape_cast %9 : vector<2x8x128xf32> to vector<16x128xf32>
    %c0_6 = arith.constant 0 : index
    %c0_7 = arith.constant 0 : index
    %11 = vector.load %arg4[%c0_6, %c0_7] : memref<128x128xf32, #tpu.memory_space<vmem>>, vector<128x128xf32>
    %cst_8 = arith.constant dense<0.000000e+00> : vector<16x128xf32>
    %12 = tpu.matmul %10, %11, %cst_8 {dimension_numbers = #tpu.dot_dimension_numbers<[1], [0], [0], [1], [0, 0, 1, 1], [], []>} : vector<16x128xf32>, vector<128x128xf32>, vector<16x128xf32> -> vector<16x128xf32>
    %c0_9 = arith.constant 0 : index
    %c0_10 = arith.constant 0 : index
    %13 = vector.load %arg5[%c0_9, %c0_10] : memref<1x128xf32, #tpu.memory_space<vmem>>, vector<1x128xf32>
    %14 = vector.broadcast %13 : vector<1x128xf32> to vector<16x128xf32>
    %15 = arith.addf %12, %14 : vector<16x128xf32>
    %cst_11 = arith.constant 0.000000e+00 : f32
    %16 = vector.broadcast %cst_11 : f32 to vector<16x128xf32>
    %17 = arith.maximumf %15, %16 : vector<16x128xf32>
    %c0_12 = arith.constant 0 : index
    %c0_13 = arith.constant 0 : index
    %18 = vector.load %arg6[%c0_12, %c0_13] : memref<128x128xf32, #tpu.memory_space<vmem>>, vector<128x128xf32>
    %cst_14 = arith.constant dense<0.000000e+00> : vector<16x128xf32>
    %19 = tpu.matmul %17, %18, %cst_14 {dimension_numbers = #tpu.dot_dimension_numbers<[1], [0], [0], [1], [0, 0, 1, 1], [], []>} : vector<16x128xf32>, vector<128x128xf32>, vector<16x128xf32> -> vector<16x128xf32>
    %20 = vector.shape_cast %19 : vector<16x128xf32> to vector<2x8x128xf32>
    %c0_15 = arith.constant 0 : index
    %c0_16 = arith.constant 0 : index
    %21 = vector.load %arg7[%c0_15, %c0_16] : memref<8x128xf32, #tpu.memory_space<vmem>>, vector<8x128xf32>
    %22 = vector.shape_cast %21 : vector<8x128xf32> to vector<1x8x128xf32>
    %23 = vector.broadcast %22 : vector<1x8x128xf32> to vector<2x8x128xf32>
    %24 = arith.mulf %20, %23 : vector<2x8x128xf32>
    %cst_17 = arith.constant dense<0.000000e+00> : vector<2x128xf32>
    %25 = vector.multi_reduction <add>, %24, %cst_17 [1] : vector<2x8x128xf32> to vector<2x128xf32>
    %c0_18 = arith.constant 0 : index
    %c0_19 = arith.constant 0 : index
    %26 = vector.load %arg8[%c0_18, %c0_19] : memref<128x128xf32, #tpu.memory_space<vmem>>, vector<128x128xf32>
    %cst_20 = arith.constant dense<0.000000e+00> : vector<2x128xf32>
    %27 = tpu.matmul %25, %26, %cst_20 {dimension_numbers = #tpu.dot_dimension_numbers<[1], [0], [0], [1], [0, 0, 1, 1], [], []>} : vector<2x128xf32>, vector<128x128xf32>, vector<2x128xf32> -> vector<2x128xf32>
    %c0_21 = arith.constant 0 : index
    %c0_22 = arith.constant 0 : index
    %28 = vector.load %arg9[%c0_21, %c0_22] : memref<2x128xf32, #tpu.memory_space<vmem>>, vector<2x128xf32>
    tpu.vector_store %arg9[%c0_21, %c0_22], %27 {strides = array<i32>} : memref<2x128xf32, #tpu.memory_space<vmem>>, vector<2x128xf32>,
    return
  }
  func.func @transform_0(%arg0: i32) -> (i32, i32) {
    %c0_i32 = arith.constant 0 : i32
    %c0_i32_0 = arith.constant 0 : i32
    return %arg0, %c0_i32 : i32, i32
  }
  func.func @transform_1(%arg0: i32) -> (i32, i32) {
    %c0_i32 = arith.constant 0 : i32
    %c0_i32_0 = arith.constant 0 : i32
    %c0_i32_1 = arith.constant 0 : i32
    return %c0_i32, %c0_i32_0 : i32, i32
  }
  func.func @transform_2(%arg0: i32) -> (i32, i32) {
    %c0_i32 = arith.constant 0 : i32
    %c0_i32_0 = arith.constant 0 : i32
    %c0_i32_1 = arith.constant 0 : i32
    return %c0_i32, %c0_i32_0 : i32, i32
  }
  func.func @transform_3(%arg0: i32) -> (i32, i32) {
    %c0_i32 = arith.constant 0 : i32
    %c0_i32_0 = arith.constant 0 : i32
    %c0_i32_1 = arith.constant 0 : i32
    return %c0_i32, %c0_i32_0 : i32, i32
  }
  func.func @transform_4(%arg0: i32) -> (i32, i32) {
    %c0_i32 = arith.constant 0 : i32
    %c0_i32_0 = arith.constant 0 : i32
    %c0_i32_1 = arith.constant 0 : i32
    return %c0_i32, %c0_i32_0 : i32, i32
  }
  func.func @transform_5(%arg0: i32) -> (i32, i32) {
    %c0_i32 = arith.constant 0 : i32
    %c0_i32_0 = arith.constant 0 : i32
    %c0_i32_1 = arith.constant 0 : i32
    return %c0_i32, %c0_i32_0 : i32, i32
  }
  func.func @transform_6(%arg0: i32) -> (i32, i32) {
    %c0_i32 = arith.constant 0 : i32
    %c0_i32_0 = arith.constant 0 : i32
    %c0_i32_1 = arith.constant 0 : i32
    return %c0_i32, %c0_i32_0 : i32, i32
  }
  func.func @transform_7(%arg0: i32) -> (i32, i32) {
    %c0_i32 = arith.constant 0 : i32
    %c0_i32_0 = arith.constant 0 : i32
    %c0_i32_1 = arith.constant 0 : i32
    return %c0_i32, %c0_i32_0 : i32, i32
  }
  func.func @transform_8(%arg0: i32) -> (i32, i32) {
    %c0_i32 = arith.constant 0 : i32
    %c0_i32_0 = arith.constant 0 : i32
    return %arg0, %c0_i32 : i32, i32
  }
}

</mosaic_0001>

<llo_original>
// kernel: tpu_custom_call.1
$region0: #{tpu_custom_call.1}
  #allocation0 [shape = 'u32[]', space=smem, size = 0x4, offset = 0x4, fixed_abs, tag = 'smem constant byte address 0x4 - core index']
  #allocation1 [shape = 'u32[72,128]{1,0:T(1,128)}', space=vmem, size = 0x9000, scoped, tag = 'internal scratch']
  %s0 = inlined_call_operand.hbm [shape: f32[16,32], index: 0, kind: input, shape index: {}]
  %s1 = inlined_call_operand.hbm [shape: f32[8,128], index: 1, kind: input, shape index: {}]
  %s2 = inlined_call_operand.hbm [shape: f32[32,128], index: 2, kind: input, shape index: {}]
  %s3 = inlined_call_operand.hbm [shape: f32[128,128], index: 3, kind: input, shape index: {}]
  %s4 = inlined_call_operand.vmem [shape: f32[1,128], index: 4, kind: input, shape index: {}]
  %s5 = inlined_call_operand.hbm [shape: f32[128,128], index: 5, kind: input, shape index: {}]
  %s6 = inlined_call_operand.hbm [shape: f32[8,128], index: 6, kind: input, shape index: {}]
  %s7 = inlined_call_operand.hbm [shape: f32[128,128], index: 7, kind: input, shape index: {}]
  %s8 = inlined_call_operand.hbm [shape: f32[2,128], index: 8, kind: output, shape index: {}]
  %s9 = sld [smem:[#allocation0]]
  $region70: #{tpu_custom_call.1} parent=0
    _
  %s11 = ssub.s32 1, %s9
  %s12 = scalar_select 0, %s11, %s9
  $region1: #{tpu_custom_call.1} parent=0
    #allocation2 [shape = 'u8[8192]{0}', space=vmem, size = 0x2000, scoped, tag = 'input window, operand 0, single buffered']
    #allocation3 [shape = 's32[1]{0}', space=sflag, size = 0x4, scoped, tag = 'scoped memory for tpu_custom_call.1']
    #allocation4 [shape = 's32[1]{0}', space=sflag, size = 0x4, scoped, tag = 'scoped memory for tpu_custom_call.1']
    #allocation5 [shape = 'u8[4096]{0}', space=vmem, size = 0x1000, scoped, tag = 'input window, operand 1, single buffered']
    #allocation6 [shape = 's32[1]{0}', space=sflag, size = 0x4, scoped, tag = 'scoped memory for tpu_custom_call.1']
    #allocation7 [shape = 'u8[16384]{0}', space=vmem, size = 0x4000, scoped, tag = 'input window, operand 2, single buffered']
    #allocation8 [shape = 'u8[65536]{0}', space=vmem, size = 0x10000, scoped, tag = 'input window, operand 3, single buffered']
    #allocation9 [shape = 's32[1]{0}', space=sflag, size = 0x4, scoped, tag = 'scoped memory for tpu_custom_call.1']
    #allocation10 [shape = 'u8[65536]{0}', space=vmem, size = 0x10000, scoped, tag = 'input window, operand 5, single buffered']
    #allocation11 [shape = 'u8[4096]{0}', space=vmem, size = 0x1000, scoped, tag = 'input window, operand 6, single buffered']
    #allocation12 [shape = 's32[1]{0}', space=sflag, size = 0x4, scoped, tag = 'scoped memory for tpu_custom_call.1']
    #allocation13 [shape = 'u8[65536]{0}', space=vmem, size = 0x10000, scoped, tag = 'input window, operand 7, single buffered']
    #allocation14 [shape = 'u8[1024]{0}', space=vmem, size = 0x400, scoped, tag = 'output window, operand 0, single buffered']
    %13 = vsyncpa [#allocation3], 0
    %14 = vsyncpa [#allocation6], 0
    %15 = vsyncpa [#allocation9], 0
    %16 = vsyncpa [#allocation12], 0
    %17 = vsyncpa [#allocation4], 0
    // Predicated region
    $region2: #{tpu_custom_call.1} parent=1 // pred_check
      _
    $region3: #{tpu_custom_call.1} parent=1 // pred_check_branch
      %19 = sbr.rel (0) target = $region5
    $region4: #{tpu_custom_call.1} parent=1 // pred_region
      %21 = vsyncadd [#allocation3], 0
      %s22 = sshll.u32 %s0, 4
      %s23 = int_to_ptr.hbm [resolvable:$true] %s22
      %s24 = sshll.u32 [#allocation2], 4
      %s25 = int_to_ptr.vmem [resolvable:$true] %s24
      %30 = dma.hbm_to_vmem [thread:$0]  %s23, 256, %s25, [#allocation3], 128, 128, 8
    $region5: #{tpu_custom_call.1} parent=1 // pred_fallthru
      _
    // Predicated region
    $region6: #{tpu_custom_call.1} parent=1 // pred_check
      _
    $region7: #{tpu_custom_call.1} parent=1 // pred_check_branch
      %32 = sbr.rel (0) target = $region9
    $region8: #{tpu_custom_call.1} parent=1 // pred_region
      %34 = vsyncadd [#allocation6], 0
      %s36 = sshll.u32 %s1, 4
      %s37 = int_to_ptr.hbm [resolvable:$true] %s36
      %s38 = sshll.u32 [#allocation5], 4
      %s39 = int_to_ptr.vmem [resolvable:$true] %s38
      %41 = dma.hbm_to_vmem [thread:$0]  %s37, 128, %s39, [#allocation6]
    $region9: #{tpu_custom_call.1} parent=1 // pred_fallthru
      _
    // Predicated region
    $region10: #{tpu_custom_call.1} parent=1 // pred_check
      _
    $region11: #{tpu_custom_call.1} parent=1 // pred_check_branch
      %43 = sbr.rel (0) target = $region13
    $region12: #{tpu_custom_call.1} parent=1 // pred_region
      %45 = vsyncadd [#allocation6], 0
      %s46 = sshll.u32 %s2, 4
      %s47 = int_to_ptr.hbm [resolvable:$true] %s46
      %s48 = sshll.u32 [#allocation7], 4
      %s49 = int_to_ptr.vmem [resolvable:$true] %s48
      %54 = dma.hbm_to_vmem [thread:$0]  %s47, 512, %s49, [#allocation6], 128, 128, 8
    $region13: #{tpu_custom_call.1} parent=1 // pred_fallthru
      _
    // Predicated region
    $region14: #{tpu_custom_call.1} parent=1 // pred_check
      _
    $region15: #{tpu_custom_call.1} parent=1 // pred_check_branch
      %56 = sbr.rel (0) target = $region17
    $region16: #{tpu_custom_call.1} parent=1 // pred_region
      %58 = vsyncadd [#allocation9], 0
      %s59 = sshll.u32 %s3, 4
      %s60 = int_to_ptr.hbm [resolvable:$true] %s59
      %s61 = sshll.u32 [#allocation8], 4
      %s62 = int_to_ptr.vmem [resolvable:$true] %s61
      %67 = dma.hbm_to_vmem [thread:$0]  %s60, 2048, %s62, [#allocation9], 128, 128, 8
    $region17: #{tpu_custom_call.1} parent=1 // pred_fallthru
      _
    // Predicated region
    $region18: #{tpu_custom_call.1} parent=1 // pred_check
      _
    $region19: #{tpu_custom_call.1} parent=1 // pred_check_branch
      %69 = sbr.rel (0) target = $region21
    $region20: #{tpu_custom_call.1} parent=1 // pred_region
      _
    $region21: #{tpu_custom_call.1} parent=1 // pred_fallthru
      _
    // Predicated region
    $region22: #{tpu_custom_call.1} parent=1 // pred_check
      _
    $region23: #{tpu_custom_call.1} parent=1 // pred_check_branch
      %71 = sbr.rel (0) target = $region25
    $region24: #{tpu_custom_call.1} parent=1 // pred_region
      %73 = vsyncadd [#allocation9], 0
      %s74 = sshll.u32 %s5, 4
      %s75 = int_to_ptr.hbm [resolvable:$true] %s74
      %s76 = sshll.u32 [#allocation10], 4
      %s77 = int_to_ptr.vmem [resolvable:$true] %s76
      %82 = dma.hbm_to_vmem [thread:$0]  %s75, 2048, %s77, [#allocation9], 128, 128, 8
    $region25: #{tpu_custom_call.1} parent=1 // pred_fallthru
      _
    // Predicated region
    $region26: #{tpu_custom_call.1} parent=1 // pred_check
      _
    $region27: #{tpu_custom_call.1} parent=1 // pred_check_branch
      %84 = sbr.rel (0) target = $region29
    $region28: #{tpu_custom_call.1} parent=1 // pred_region
      %86 = vsyncadd [#allocation12], 0
      %s88 = sshll.u32 %s6, 4
      %s89 = int_to_ptr.hbm [resolvable:$true] %s88
      %s90 = sshll.u32 [#allocation11], 4
      %s91 = int_to_ptr.vmem [resolvable:$true] %s90
      %93 = dma.hbm_to_vmem [thread:$0]  %s89, 128, %s91, [#allocation12]
    $region29: #{tpu_custom_call.1} parent=1 // pred_fallthru
      _
    // Predicated region
    $region30: #{tpu_custom_call.1} parent=1 // pred_check
      _
    $region31: #{tpu_custom_call.1} parent=1 // pred_check_branch
      %95 = sbr.rel (0) target = $region33
    $region32: #{tpu_custom_call.1} parent=1 // pred_region
      %97 = vsyncadd [#allocation12], 0
      %s98 = sshll.u32 %s7, 4
      %s99 = int_to_ptr.hbm [resolvable:$true] %s98
      %s100 = sshll.u32 [#allocation13], 4
      %s101 = int_to_ptr.vmem [resolvable:$true] %s100
      %106 = dma.hbm_to_vmem [thread:$0]  %s99, 2048, %s101, [#allocation12], 128, 128, 8
    $region33: #{tpu_custom_call.1} parent=1 // pred_fallthru
      _
    // Predicated region
    $region34: #{tpu_custom_call.1} parent=1 // pred_check
      _
    $region35: #{tpu_custom_call.1} parent=1 // pred_check_branch
      %108 = sbr.rel (0) target = $region37
    $region36: #{tpu_custom_call.1} parent=1 // pred_region
      %110 = dma.done [#allocation3], 256
    $region37: #{tpu_custom_call.1} parent=1 // pred_fallthru
      _
    // Predicated region
    $region38: #{tpu_custom_call.1} parent=1 // pred_check
      _
    $region39: #{tpu_custom_call.1} parent=1 // pred_check_branch
      %112 = sbr.rel (0) target = $region41
    $region40: #{tpu_custom_call.1} parent=1 // pred_region
      %114 = dma.done [#allocation6], 128
    $region41: #{tpu_custom_call.1} parent=1 // pred_fallthru
      _
    // Predicated region
    $region42: #{tpu_custom_call.1} parent=1 // pred_check
      _
    $region43: #{tpu_custom_call.1} parent=1 // pred_check_branch
      %116 = sbr.rel (0) target = $region45
    $region44: #{tpu_custom_call.1} parent=1 // pred_region
      %118 = dma.done [#allocation6], 512
    $region45: #{tpu_custom_call.1} parent=1 // pred_fallthru
      _
    // Predicated region
    $region46: #{tpu_custom_call.1} parent=1 // pred_check
      _
    $region47: #{tpu_custom_call.1} parent=1 // pred_check_branch
      %120 = sbr.rel (0) target = $region49
    $region48: #{tpu_custom_call.1} parent=1 // pred_region
      %122 = dma.done [#allocation9], 2048
    $region49: #{tpu_custom_call.1} parent=1 // pred_fallthru
      _
    // Predicated region
    $region50: #{tpu_custom_call.1} parent=1 // pred_check
      _
    $region51: #{tpu_custom_call.1} parent=1 // pred_check_branch
      %124 = sbr.rel (0) target = $region53
    $region52: #{tpu_custom_call.1} parent=1 // pred_region
      %126 = dma.done [#allocation9], 2048
    $region53: #{tpu_custom_call.1} parent=1 // pred_fallthru
      _
    // Predicated region
    $region54: #{tpu_custom_call.1} parent=1 // pred_check
      _
    $region55: #{tpu_custom_call.1} parent=1 // pred_check_branch
      %128 = sbr.rel (0) target = $region57
    $region56: #{tpu_custom_call.1} parent=1 // pred_region
      %130 = dma.done [#allocation12], 128
    $region57: #{tpu_custom_call.1} parent=1 // pred_fallthru
      _
    // Predicated region
    $region58: #{tpu_custom_call.1} parent=1 // pred_check
      _
    $region59: #{tpu_custom_call.1} parent=1 // pred_check_branch
      %132 = sbr.rel (0) target = $region61
    $region60: #{tpu_custom_call.1} parent=1 // pred_region
      %134 = dma.done [#allocation12], 2048
    $region61: #{tpu_custom_call.1} parent=1 // pred_fallthru
      _
    %v135 = vld [vmem:[#allocation2] sm:$0xff]
    %v136 = vld [vmem:[#allocation2 + $0x8] sm:$0xff]
    %v137 = vld [vmem:[#allocation7] sm:$0xff]
    %v138 = vld [vmem:[#allocation7 + $0x8] sm:$0xff]
    %v139 = vld [vmem:[#allocation7 + $0x10] sm:$0xff]
    %v140 = vld [vmem:[#allocation7 + $0x18] sm:$0xff]
    %vm141 = vcmask 261120
    %v143 = vsel %vm141, %v135, 0
    %v146 = vsel %vm141, %v136, 0
    %148 = vmatpush.msra.mxu0 0.0
    %149 = vmatpush.msra.mxu0 0.0
    %150 = vmatpush.msra.mxu0 0.0
    %151 = vmatpush.msra.mxu0 0.0
    %152 = vmatpush.msra.mxu0 0.0
    %153 = vmatpush.msra.mxu0 0.0
    %154 = vmatpush.msra.mxu0 0.0
    %155 = vmatpush.msra.mxu0 0.0
    %156 = vmatpush.msra.mxu0 0.0
    %157 = vmatpush.msra.mxu0 0.0
    %158 = vmatpush.msra.mxu0 0.0
    %159 = vmatpush.msra.mxu0 0.0
    %160 = vmatpush.msra.mxu0 %v140
    %161 = vmatpush.msra.mxu0 %v139
    %162 = vmatpush.msra.mxu0 %v138
    %163 = vmatpush.msra.mxu0 %v137
    %164 = vmatmul.f32.gmra.mxu0 %v143
    %v165 = vpop.f32.mrf.mxu0
    %v166 = vadd.f32 0.0, %v165
    %167 = vmatmul.f32.gmra.mxu0 %v146
    %v168 = vpop.f32.mrf.mxu0
    %v169 = vadd.f32 0.0, %v168
    %170 = vdwg.mxu0
    %v171 = vld [vmem:[#allocation5] sm:$0xff]
    %v172 = vadd.f32 %v166, %v171
    %v173 = vadd.f32 %v169, %v171
    %v174 = vmax.f32 %v172, 0.0
    %v175 = vmax.f32 %v173, 0.0
    %v176 = vld [vmem:[#allocation8] sm:$0xff]
    %v177 = vld [vmem:[#allocation8 + $0x8] sm:$0xff]
    %v178 = vld [vmem:[#allocation8 + $0x10] sm:$0xff]
    %v179 = vld [vmem:[#allocation8 + $0x18] sm:$0xff]
    %v180 = vld [vmem:[#allocation8 + $0x20] sm:$0xff]
    %v181 = vld [vmem:[#allocation8 + $0x28] sm:$0xff]
    %v182 = vld [vmem:[#allocation8 + $0x30] sm:$0xff]
    %v183 = vld [vmem:[#allocation8 + $0x38] sm:$0xff]
    %v184 = vld [vmem:[#allocation8 + $0x40] sm:$0xff]
    %v185 = vld [vmem:[#allocation8 + $0x48] sm:$0xff]
    %v186 = vld [vmem:[#allocation8 + $0x50] sm:$0xff]
    %v187 = vld [vmem:[#allocation8 + $0x58] sm:$0xff]
    %v188 = vld [vmem:[#allocation8 + $0x60] sm:$0xff]
    %v189 = vld [vmem:[#allocation8 + $0x68] sm:$0xff]
    %v190 = vld [vmem:[#allocation8 + $0x70] sm:$0xff]
    %v191 = vld [vmem:[#allocation8 + $0x78] sm:$0xff]
    %v192 = vld [vmem:[%s4] sm:$0x1]
    %v194 = vperm.slane %v192, 0
    %196 = vmatpush.msra.mxu0 %v191
    %197 = vmatpush.msra.mxu0 %v190
    %198 = vmatpush.msra.mxu0 %v189
    %199 = vmatpush.msra.mxu0 %v188
    %200 = vmatpush.msra.mxu0 %v187
    %201 = vmatpush.msra.mxu0 %v186
    %202 = vmatpush.msra.mxu0 %v185
    %203 = vmatpush.msra.mxu0 %v184
    %204 = vmatpush.msra.mxu0 %v183
    %205 = vmatpush.msra.mxu0 %v182
    %206 = vmatpush.msra.mxu0 %v181
    %207 = vmatpush.msra.mxu0 %v180
    %208 = vmatpush.msra.mxu0 %v179
    %209 = vmatpush.msra.mxu0 %v178
    %210 = vmatpush.msra.mxu0 %v177
    %211 = vmatpush.msra.mxu0 %v176
    %212 = vmatmul.f32.gmra.mxu0 %v174
    %v213 = vpop.f32.mrf.mxu0
    %v214 = vadd.f32 %v194, %v213
    %215 = vmatmul.f32.gmra.mxu0 %v175
    %v216 = vpop.f32.mrf.mxu0
    %v217 = vadd.f32 %v194, %v216
    %218 = vdwg.mxu0
    %v219 = vmax.f32 %v214, 0.0
    %v220 = vmax.f32 %v217, 0.0
    %v221 = vld [vmem:[#allocation10] sm:$0xff]
    %v222 = vld [vmem:[#allocation10 + $0x8] sm:$0xff]
    %v223 = vld [vmem:[#allocation10 + $0x10] sm:$0xff]
    %v224 = vld [vmem:[#allocation10 + $0x18] sm:$0xff]
    %v225 = vld [vmem:[#allocation10 + $0x20] sm:$0xff]
    %v226 = vld [vmem:[#allocation10 + $0x28] sm:$0xff]
    %v227 = vld [vmem:[#allocation10 + $0x30] sm:$0xff]
    %v228 = vld [vmem:[#allocation10 + $0x38] sm:$0xff]
    %v229 = vld [vmem:[#allocation10 + $0x40] sm:$0xff]
    %v230 = vld [vmem:[#allocation10 + $0x48] sm:$0xff]
    %v231 = vld [vmem:[#allocation10 + $0x50] sm:$0xff]
    %v232 = vld [vmem:[#allocation10 + $0x58] sm:$0xff]
    %v233 = vld [vmem:[#allocation10 + $0x60] sm:$0xff]
    %v234 = vld [vmem:[#allocation10 + $0x68] sm:$0xff]
    %v235 = vld [vmem:[#allocation10 + $0x70] sm:$0xff]
    %v236 = vld [vmem:[#allocation10 + $0x78] sm:$0xff]
    %237 = vmatpush.msra.mxu0 %v236
    %238 = vmatpush.msra.mxu0 %v235
    %239 = vmatpush.msra.mxu0 %v234
    %240 = vmatpush.msra.mxu0 %v233
    %241 = vmatpush.msra.mxu0 %v232
    %242 = vmatpush.msra.mxu0 %v231
    %243 = vmatpush.msra.mxu0 %v230
    %244 = vmatpush.msra.mxu0 %v229
    %245 = vmatpush.msra.mxu0 %v228
    %246 = vmatpush.msra.mxu0 %v227
    %247 = vmatpush.msra.mxu0 %v226
    %248 = vmatpush.msra.mxu0 %v225
    %249 = vmatpush.msra.mxu0 %v224
    %250 = vmatpush.msra.mxu0 %v223
    %251 = vmatpush.msra.mxu0 %v222
    %252 = vmatpush.msra.mxu0 %v221
    %253 = vmatmul.f32.gmra.mxu0 %v219
    %v254 = vpop.f32.mrf.mxu0
    %v255 = vadd.f32 0.0, %v254
    %256 = vmatmul.f32.gmra.mxu0 %v220
    %v257 = vpop.f32.mrf.mxu0
    %v258 = vadd.f32 0.0, %v257
    %259 = vdwg.mxu0
    %v260 = vld [vmem:[#allocation11] sm:$0xff]
    %v261 = vmul.f32 %v255, %v260
    %v262 = vmul.f32 %v258, %v260
    %v263 = vrot.slane %v261, 4
    %v264 = vadd.f32 %v261, %v263
    %v265 = vrot.slane %v264, 2
    %v266 = vadd.f32 %v264, %v265
    %v267 = vrot.slane %v266, 1
    %v268 = vadd.f32 %v266, %v267
    %v269 = vrot.slane %v262, 4
    %v270 = vadd.f32 %v262, %v269
    %v271 = vrot.slane %v270, 2
    %v272 = vadd.f32 %v270, %v271
    %v273 = vrot.slane %v272, 1
    %v274 = vadd.f32 %v272, %v273
    %v275 = vld [vmem:[#allocation13] sm:$0xff]
    %v276 = vld [vmem:[#allocation13 + $0x8] sm:$0xff]
    %v277 = vld [vmem:[#allocation13 + $0x10] sm:$0xff]
    %v278 = vld [vmem:[#allocation13 + $0x18] sm:$0xff]
    %v279 = vld [vmem:[#allocation13 + $0x20] sm:$0xff]
    %v280 = vld [vmem:[#allocation13 + $0x28] sm:$0xff]
    %v281 = vld [vmem:[#allocation13 + $0x30] sm:$0xff]
    %v282 = vld [vmem:[#allocation13 + $0x38] sm:$0xff]
    %v283 = vld [vmem:[#allocation13 + $0x40] sm:$0xff]
    %v284 = vld [vmem:[#allocation13 + $0x48] sm:$0xff]
    %v285 = vld [vmem:[#allocation13 + $0x50] sm:$0xff]
    %v286 = vld [vmem:[#allocation13 + $0x58] sm:$0xff]
    %v287 = vld [vmem:[#allocation13 + $0x60] sm:$0xff]
    %v288 = vld [vmem:[#allocation13 + $0x68] sm:$0xff]
    %v289 = vld [vmem:[#allocation13 + $0x70] sm:$0xff]
    %v290 = vld [vmem:[#allocation13 + $0x78] sm:$0xff]
    %vm293 = vcmask 1041409
    %v294 = vsel %vm293, %v274, %v268
    %296 = vmatpush.msra.mxu0 %v290
    %297 = vmatpush.msra.mxu0 %v289
    %298 = vmatpush.msra.mxu0 %v288
    %299 = vmatpush.msra.mxu0 %v287
    %300 = vmatpush.msra.mxu0 %v286
    %301 = vmatpush.msra.mxu0 %v285
    %302 = vmatpush.msra.mxu0 %v284
    %303 = vmatpush.msra.mxu0 %v283
    %304 = vmatpush.msra.mxu0 %v282
    %305 = vmatpush.msra.mxu0 %v281
    %306 = vmatpush.msra.mxu0 %v280
    %307 = vmatpush.msra.mxu0 %v279
    %308 = vmatpush.msra.mxu0 %v278
    %309 = vmatpush.msra.mxu0 %v277
    %310 = vmatpush.msra.mxu0 %v276
    %311 = vmatpush.msra.mxu0 %v275
    %312 = vmatmul.f32.gmra.mxu0 %v294
    %v313 = vpop.f32.mrf.mxu0
    %v314 = vadd.f32 0.0, %v313
    %315 = vdwg.mxu0
    %316 = vst [vmem:[#allocation14] sm:$0x3] %v314
    // Predicated region
    $region62: #{tpu_custom_call.1} parent=1 // pred_check
      _
    $region63: #{tpu_custom_call.1} parent=1 // pred_check_branch
      %318 = sbr.rel (0) target = $region65
    $region64: #{tpu_custom_call.1} parent=1 // pred_region
      %320 = vsyncadd [#allocation4], 0
      %s322 = sshll.u32 [#allocation14], 4
      %s323 = int_to_ptr.vmem [resolvable:$true] %s322
      %s324 = sshll.u32 %s8, 4
      %s325 = int_to_ptr.hbm [resolvable:$true] %s324
      %327 = dma.vmem_to_hbm [thread:$0]  %s323, 32, %s325, [#allocation4]
    $region65: #{tpu_custom_call.1} parent=1 // pred_fallthru
      _
    // Predicated region
    $region66: #{tpu_custom_call.1} parent=1 // pred_check
      _
    $region67: #{tpu_custom_call.1} parent=1 // pred_check_branch
      %329 = sbr.rel (0) target = $region69
    $region68: #{tpu_custom_call.1} parent=1 // pred_region
      %331 = dma.done [#allocation4], 32
    $region69: #{tpu_custom_call.1} parent=1 // pred_fallthru
      _
    %332 = vsyncpa [#allocation3], 1
    %333 = vsyncpa [#allocation6], 1
    %334 = vsyncpa [#allocation9], 1
    %335 = vsyncpa [#allocation12], 1
    %336 = vsyncpa [#allocation4], 1

// kernel: tpu_custom_call.1
$region0: #{tpu_custom_call.1}
  #allocation0 [shape = 'u32[]', space=smem, size = 0x4, offset = 0x4, fixed_abs, tag = 'smem constant byte address 0x4 - core index']
  #allocation1 [shape = 'u32[72,128]{1,0:T(1,128)}', space=vmem, size = 0x9000, scoped, tag = 'internal scratch']
  %s0 = inlined_call_operand.hbm [shape: f32[16,32], index: 0, kind: input, shape index: {}]
  %s1 = inlined_call_operand.hbm [shape: f32[8,128], index: 1, kind: input, shape index: {}]
  %s2 = inlined_call_operand.hbm [shape: f32[32,128], index: 2, kind: input, shape index: {}]
  %s3 = inlined_call_operand.hbm [shape: f32[128,128], index: 3, kind: input, shape index: {}]
  %s4 = inlined_call_operand.vmem [shape: f32[1,128], index: 4, kind: input, shape index: {}]
  %s5 = inlined_call_operand.hbm [shape: f32[128,128], index: 5, kind: input, shape index: {}]
  %s6 = inlined_call_operand.hbm [shape: f32[8,128], index: 6, kind: input, shape index: {}]
  %s7 = inlined_call_operand.hbm [shape: f32[128,128], index: 7, kind: input, shape index: {}]
  %s8 = inlined_call_operand.hbm [shape: f32[2,128], index: 8, kind: output, shape index: {}]
  %s9 = sld [smem:[#allocation0]]
  $region70: #{tpu_custom_call.1} parent=0
    _
  %s11 = ssub.s32 1, %s9
  %s12 = scalar_select 0, %s11, %s9
  $region1: #{tpu_custom_call.1} parent=0
    #allocation2 [shape = 'u8[8192]{0}', space=vmem, size = 0x2000, scoped, tag = 'input window, operand 0, single buffered']
    #allocation3 [shape = 's32[1]{0}', space=sflag, size = 0x4, scoped, tag = 'scoped memory for tpu_custom_call.1']
    #allocation4 [shape = 's32[1]{0}', space=sflag, size = 0x4, scoped, tag = 'scoped memory for tpu_custom_call.1']
    #allocation5 [shape = 'u8[4096]{0}', space=vmem, size = 0x1000, scoped, tag = 'input window, operand 1, single buffered']
    #allocation6 [shape = 's32[1]{0}', space=sflag, size = 0x4, scoped, tag = 'scoped memory for tpu_custom_call.1']
    #allocation7 [shape = 'u8[16384]{0}', space=vmem, size = 0x4000, scoped, tag = 'input window, operand 2, single buffered']
    #allocation8 [shape = 'u8[65536]{0}', space=vmem, size = 0x10000, scoped, tag = 'input window, operand 3, single buffered']
    #allocation9 [shape = 's32[1]{0}', space=sflag, size = 0x4, scoped, tag = 'scoped memory for tpu_custom_call.1']
    #allocation10 [shape = 'u8[65536]{0}', space=vmem, size = 0x10000, scoped, tag = 'input window, operand 5, single buffered']
    #allocation11 [shape = 'u8[4096]{0}', space=vmem, size = 0x1000, scoped, tag = 'input window, operand 6, single buffered']
    #allocation12 [shape = 's32[1]{0}', space=sflag, size = 0x4, scoped, tag = 'scoped memory for tpu_custom_call.1']
    #allocation13 [shape = 'u8[65536]{0}', space=vmem, size = 0x10000, scoped, tag = 'input window, operand 7, single buffered']
    #allocation14 [shape = 'u8[1024]{0}', space=vmem, size = 0x400, scoped, tag = 'output window, operand 0, single buffered']
    %13 = vsyncpa [#allocation3], 0
    %14 = vsyncpa [#allocation6], 0
    %15 = vsyncpa [#allocation9], 0
    %16 = vsyncpa [#allocation12], 0
    %17 = vsyncpa [#allocation4], 0
    // Predicated region
    $region2: #{tpu_custom_call.1} parent=1 // pred_check
      _
    $region3: #{tpu_custom_call.1} parent=1 // pred_check_branch
      %19 = sbr.rel (0) target = $region5
    $region4: #{tpu_custom_call.1} parent=1 // pred_region
      %21 = vsyncadd [#allocation3], 0
      %s22 = sshll.u32 %s0, 4
      %s23 = int_to_ptr.hbm [resolvable:$true] %s22
      %s24 = sshll.u32 [#allocation2], 4
      %s25 = int_to_ptr.vmem [resolvable:$true] %s24
      %30 = dma.hbm_to_vmem [thread:$0]  %s23, 256, %s25, [#allocation3], 128, 128, 8
    $region5: #{tpu_custom_call.1} parent=1 // pred_fallthru
      _
    // Predicated region
    $region6: #{tpu_custom_call.1} parent=1 // pred_check
      _
    $region7: #{tpu_custom_call.1} parent=1 // pred_check_branch
      %32 = sbr.rel (0) target = $region9
    $region8: #{tpu_custom_call.1} parent=1 // pred_region
      %34 = vsyncadd [#allocation6], 0
      %s36 = sshll.u32 %s1, 4
      %s37 = int_to_ptr.hbm [resolvable:$true] %s36
      %s38 = sshll.u32 [#allocation5], 4
      %s39 = int_to_ptr.vmem [resolvable:$true] %s38
      %41 = dma.hbm_to_vmem [thread:$0]  %s37, 128, %s39, [#allocation6]
    $region9: #{tpu_custom_call.1} parent=1 // pred_fallthru
      _
    // Predicated region
    $region10: #{tpu_custom_call.1} parent=1 // pred_check
      _
    $region11: #{tpu_custom_call.1} parent=1 // pred_check_branch
      %43 = sbr.rel (0) target = $region13
    $region12: #{tpu_custom_call.1} parent=1 // pred_region
      %45 = vsyncadd [#allocation6], 0
      %s46 = sshll.u32 %s2, 4
      %s47 = int_to_ptr.hbm [resolvable:$true] %s46
      %s48 = sshll.u32 [#allocation7], 4
      %s49 = int_to_ptr.vmem [resolvable:$true] %s48
      %54 = dma.hbm_to_vmem [thread:$0]  %s47, 512, %s49, [#allocation6], 128, 128, 8
    $region13: #{tpu_custom_call.1} parent=1 // pred_fallthru
      _
    // Predicated region
    $region14: #{tpu_custom_call.1} parent=1 // pred_check
      _
    $region15: #{tpu_custom_call.1} parent=1 // pred_check_branch
      %56 = sbr.rel (0) target = $region17
    $region16: #{tpu_custom_call.1} parent=1 // pred_region
      %58 = vsyncadd [#allocation9], 0
      %s59 = sshll.u32 %s3, 4
      %s60 = int_to_ptr.hbm [resolvable:$true] %s59
      %s61 = sshll.u32 [#allocation8], 4
      %s62 = int_to_ptr.vmem [resolvable:$true] %s61
      %67 = dma.hbm_to_vmem [thread:$0]  %s60, 2048, %s62, [#allocation9], 128, 128, 8
    $region17: #{tpu_custom_call.1} parent=1 // pred_fallthru
      _
    // Predicated region
    $region18: #{tpu_custom_call.1} parent=1 // pred_check
      _
    $region19: #{tpu_custom_call.1} parent=1 // pred_check_branch
      %69 = sbr.rel (0) target = $region21
    $region20: #{tpu_custom_call.1} parent=1 // pred_region
      _
    $region21: #{tpu_custom_call.1} parent=1 // pred_fallthru
      _
    // Predicated region
    $region22: #{tpu_custom_call.1} parent=1 // pred_check
      _
    $region23: #{tpu_custom_call.1} parent=1 // pred_check_branch
      %71 = sbr.rel (0) target = $region25
    $region24: #{tpu_custom_call.1} parent=1 // pred_region
      %73 = vsyncadd [#allocation9], 0
      %s74 = sshll.u32 %s5, 4
      %s75 = int_to_ptr.hbm [resolvable:$true] %s74
      %s76 = sshll.u32 [#allocation10], 4
      %s77 = int_to_ptr.vmem [resolvable:$true] %s76
      %82 = dma.hbm_to_vmem [thread:$0]  %s75, 2048, %s77, [#allocation9], 128, 128, 8
    $region25: #{tpu_custom_call.1} parent=1 // pred_fallthru
      _
    // Predicated region
    $region26: #{tpu_custom_call.1} parent=1 // pred_check
      _
    $region27: #{tpu_custom_call.1} parent=1 // pred_check_branch
      %84 = sbr.rel (0) target = $region29
    $region28: #{tpu_custom_call.1} parent=1 // pred_region
      %86 = vsyncadd [#allocation12], 0
      %s88 = sshll.u32 %s6, 4
      %s89 = int_to_ptr.hbm [resolvable:$true] %s88
      %s90 = sshll.u32 [#allocation11], 4
      %s91 = int_to_ptr.vmem [resolvable:$true] %s90
      %93 = dma.hbm_to_vmem [thread:$0]  %s89, 128, %s91, [#allocation12]
    $region29: #{tpu_custom_call.1} parent=1 // pred_fallthru
      _
    // Predicated region
    $region30: #{tpu_custom_call.1} parent=1 // pred_check
      _
    $region31: #{tpu_custom_call.1} parent=1 // pred_check_branch
      %95 = sbr.rel (0) target = $region33
    $region32: #{tpu_custom_call.1} parent=1 // pred_region
      %97 = vsyncadd [#allocation12], 0
      %s98 = sshll.u32 %s7, 4
      %s99 = int_to_ptr.hbm [resolvable:$true] %s98
      %s100 = sshll.u32 [#allocation13], 4
      %s101 = int_to_ptr.vmem [resolvable:$true] %s100
      %106 = dma.hbm_to_vmem [thread:$0]  %s99, 2048, %s101, [#allocation12], 128, 128, 8
    $region33: #{tpu_custom_call.1} parent=1 // pred_fallthru
      _
    // Predicated region
    $region34: #{tpu_custom_call.1} parent=1 // pred_check
      _
    $region35: #{tpu_custom_call.1} parent=1 // pred_check_branch
      %108 = sbr.rel (0) target = $region37
    $region36: #{tpu_custom_call.1} parent=1 // pred_region
      %110 = dma.done [#allocation3], 256
    $region37: #{tpu_custom_call.1} parent=1 // pred_fallthru
      _
    // Predicated region
    $region38: #{tpu_custom_call.1} parent=1 // pred_check
      _
    $region39: #{tpu_custom_call.1} parent=1 // pred_check_branch
      %112 = sbr.rel (0) target = $region41
    $region40: #{tpu_custom_call.1} parent=1 // pred_region
      %114 = dma.done [#allocation6], 128
    $region41: #{tpu_custom_call.1} parent=1 // pred_fallthru
      _
    // Predicated region
    $region42: #{tpu_custom_call.1} parent=1 // pred_check
      _
    $region43: #{tpu_custom_call.1} parent=1 // pred_check_branch
      %116 = sbr.rel (0) target = $region45
    $region44: #{tpu_custom_call.1} parent=1 // pred_region
      %118 = dma.done [#allocation6], 512
    $region45: #{tpu_custom_call.1} parent=1 // pred_fallthru
      _
    // Predicated region
    $region46: #{tpu_custom_call.1} parent=1 // pred_check
      _
    $region47: #{tpu_custom_call.1} parent=1 // pred_check_branch
      %120 = sbr.rel (0) target = $region49
    $region48: #{tpu_custom_call.1} parent=1 // pred_region
      %122 = dma.done [#allocation9], 2048
    $region49: #{tpu_custom_call.1} parent=1 // pred_fallthru
      _
    // Predicated region
    $region50: #{tpu_custom_call.1} parent=1 // pred_check
      _
    $region51: #{tpu_custom_call.1} parent=1 // pred_check_branch
      %124 = sbr.rel (0) target = $region53
    $region52: #{tpu_custom_call.1} parent=1 // pred_region
      %126 = dma.done [#allocation9], 2048
    $region53: #{tpu_custom_call.1} parent=1 // pred_fallthru
      _
    // Predicated region
    $region54: #{tpu_custom_call.1} parent=1 // pred_check
      _
    $region55: #{tpu_custom_call.1} parent=1 // pred_check_branch
      %128 = sbr.rel (0) target = $region57
    $region56: #{tpu_custom_call.1} parent=1 // pred_region
      %130 = dma.done [#allocation12], 128
    $region57: #{tpu_custom_call.1} parent=1 // pred_fallthru
      _
    // Predicated region
    $region58: #{tpu_custom_call.1} parent=1 // pred_check
      _
    $region59: #{tpu_custom_call.1} parent=1 // pred_check_branch
      %132 = sbr.rel (0) target = $region61
    $region60: #{tpu_custom_call.1} parent=1 // pred_region
      %134 = dma.done [#allocation12], 2048
    $region61: #{tpu_custom_call.1} parent=1 // pred_fallthru
      _
    %v135 = vld [vmem:[#allocation2] sm:$0xff]
    %v136 = vld [vmem:[#allocation2 + $0x8] sm:$0xff]
    %v137 = vld [vmem:[#allocation7] sm:$0xff]
    %v138 = vld [vmem:[#allocation7 + $0x8] sm:$0xff]
    %v139 = vld [vmem:[#allocation7 + $0x10] sm:$0xff]
    %v140 = vld [vmem:[#allocation7 + $0x18] sm:$0xff]
    %vm141 = vcmask 261120
    %v143 = vsel %vm141, %v135, 0
    %v146 = vsel %vm141, %v136, 0
    %148 = vmatpush.msra.mxu0 0.0
    %149 = vmatpush.msra.mxu0 0.0
    %150 = vmatpush.msra.mxu0 0.0
    %151 = vmatpush.msra.mxu0 0.0
    %152 = vmatpush.msra.mxu0 0.0
    %153 = vmatpush.msra.mxu0 0.0
    %154 = vmatpush.msra.mxu0 0.0
    %155 = vmatpush.msra.mxu0 0.0
    %156 = vmatpush.msra.mxu0 0.0
    %157 = vmatpush.msra.mxu0 0.0
    %158 = vmatpush.msra.mxu0 0.0
    %159 = vmatpush.msra.mxu0 0.0
    %160 = vmatpush.msra.mxu0 %v140
    %161 = vmatpush.msra.mxu0 %v139
    %162 = vmatpush.msra.mxu0 %v138
    %163 = vmatpush.msra.mxu0 %v137
    %164 = vmatmul.f32.gmra.mxu0 %v143
    %v165 = vpop.f32.mrf.mxu0
    %v166 = vadd.f32 0.0, %v165
    %167 = vmatmul.f32.gmra.mxu0 %v146
    %v168 = vpop.f32.mrf.mxu0
    %v169 = vadd.f32 0.0, %v168
    %170 = vdwg.mxu0
    %v171 = vld [vmem:[#allocation5] sm:$0xff]
    %v172 = vadd.f32 %v166, %v171
    %v173 = vadd.f32 %v169, %v171
    %v174 = vmax.f32 %v172, 0.0
    %v175 = vmax.f32 %v173, 0.0
    %v176 = vld [vmem:[#allocation8] sm:$0xff]
    %v177 = vld [vmem:[#allocation8 + $0x8] sm:$0xff]
    %v178 = vld [vmem:[#allocation8 + $0x10] sm:$0xff]
    %v179 = vld [vmem:[#allocation8 + $0x18] sm:$0xff]
    %v180 = vld [vmem:[#allocation8 + $0x20] sm:$0xff]
    %v181 = vld [vmem:[#allocation8 + $0x28] sm:$0xff]
    %v182 = vld [vmem:[#allocation8 + $0x30] sm:$0xff]
    %v183 = vld [vmem:[#allocation8 + $0x38] sm:$0xff]
    %v184 = vld [vmem:[#allocation8 + $0x40] sm:$0xff]
    %v185 = vld [vmem:[#allocation8 + $0x48] sm:$0xff]
    %v186 = vld [vmem:[#allocation8 + $0x50] sm:$0xff]
    %v187 = vld [vmem:[#allocation8 + $0x58] sm:$0xff]
    %v188 = vld [vmem:[#allocation8 + $0x60] sm:$0xff]
    %v189 = vld [vmem:[#allocation8 + $0x68] sm:$0xff]
    %v190 = vld [vmem:[#allocation8 + $0x70] sm:$0xff]
    %v191 = vld [vmem:[#allocation8 + $0x78] sm:$0xff]
    %v192 = vld [vmem:[%s4] sm:$0x1]
    %v194 = vperm.slane %v192, 0
    %196 = vmatpush.msra.mxu0 %v191
    %197 = vmatpush.msra.mxu0 %v190
    %198 = vmatpush.msra.mxu0 %v189
    %199 = vmatpush.msra.mxu0 %v188
    %200 = vmatpush.msra.mxu0 %v187
    %201 = vmatpush.msra.mxu0 %v186
    %202 = vmatpush.msra.mxu0 %v185
    %203 = vmatpush.msra.mxu0 %v184
    %204 = vmatpush.msra.mxu0 %v183
    %205 = vmatpush.msra.mxu0 %v182
    %206 = vmatpush.msra.mxu0 %v181
    %207 = vmatpush.msra.mxu0 %v180
    %208 = vmatpush.msra.mxu0 %v179
    %209 = vmatpush.msra.mxu0 %v178
    %210 = vmatpush.msra.mxu0 %v177
    %211 = vmatpush.msra.mxu0 %v176
    %212 = vmatmul.f32.gmra.mxu0 %v174
    %v213 = vpop.f32.mrf.mxu0
    %v214 = vadd.f32 %v194, %v213
    %215 = vmatmul.f32.gmra.mxu0 %v175
    %v216 = vpop.f32.mrf.mxu0
    %v217 = vadd.f32 %v194, %v216
    %218 = vdwg.mxu0
    %v219 = vmax.f32 %v214, 0.0
    %v220 = vmax.f32 %v217, 0.0
    %v221 = vld [vmem:[#allocation10] sm:$0xff]
    %v222 = vld [vmem:[#allocation10 + $0x8] sm:$0xff]
    %v223 = vld [vmem:[#allocation10 + $0x10] sm:$0xff]
    %v224 = vld [vmem:[#allocation10 + $0x18] sm:$0xff]
    %v225 = vld [vmem:[#allocation10 + $0x20] sm:$0xff]
    %v226 = vld [vmem:[#allocation10 + $0x28] sm:$0xff]
    %v227 = vld [vmem:[#allocation10 + $0x30] sm:$0xff]
    %v228 = vld [vmem:[#allocation10 + $0x38] sm:$0xff]
    %v229 = vld [vmem:[#allocation10 + $0x40] sm:$0xff]
    %v230 = vld [vmem:[#allocation10 + $0x48] sm:$0xff]
    %v231 = vld [vmem:[#allocation10 + $0x50] sm:$0xff]
    %v232 = vld [vmem:[#allocation10 + $0x58] sm:$0xff]
    %v233 = vld [vmem:[#allocation10 + $0x60] sm:$0xff]
    %v234 = vld [vmem:[#allocation10 + $0x68] sm:$0xff]
    %v235 = vld [vmem:[#allocation10 + $0x70] sm:$0xff]
    %v236 = vld [vmem:[#allocation10 + $0x78] sm:$0xff]
    %237 = vmatpush.msra.mxu0 %v236
    %238 = vmatpush.msra.mxu0 %v235
    %239 = vmatpush.msra.mxu0 %v234
    %240 = vmatpush.msra.mxu0 %v233
    %241 = vmatpush.msra.mxu0 %v232
    %242 = vmatpush.msra.mxu0 %v231
    %243 = vmatpush.msra.mxu0 %v230
    %244 = vmatpush.msra.mxu0 %v229
    %245 = vmatpush.msra.mxu0 %v228
    %246 = vmatpush.msra.mxu0 %v227
    %247 = vmatpush.msra.mxu0 %v226
    %248 = vmatpush.msra.mxu0 %v225
    %249 = vmatpush.msra.mxu0 %v224
    %250 = vmatpush.msra.mxu0 %v223
    %251 = vmatpush.msra.mxu0 %v222
    %252 = vmatpush.msra.mxu0 %v221
    %253 = vmatmul.f32.gmra.mxu0 %v219
    %v254 = vpop.f32.mrf.mxu0
    %v255 = vadd.f32 0.0, %v254
    %256 = vmatmul.f32.gmra.mxu0 %v220
    %v257 = vpop.f32.mrf.mxu0
    %v258 = vadd.f32 0.0, %v257
    %259 = vdwg.mxu0
    %v260 = vld [vmem:[#allocation11] sm:$0xff]
    %v261 = vmul.f32 %v255, %v260
    %v262 = vmul.f32 %v258, %v260
    %v263 = vrot.slane %v261, 4
    %v264 = vadd.f32 %v261, %v263
    %v265 = vrot.slane %v264, 2
    %v266 = vadd.f32 %v264, %v265
    %v267 = vrot.slane %v266, 1
    %v268 = vadd.f32 %v266, %v267
    %v269 = vrot.slane %v262, 4
    %v270 = vadd.f32 %v262, %v269
    %v271 = vrot.slane %v270, 2
    %v272 = vadd.f32 %v270, %v271
    %v273 = vrot.slane %v272, 1
    %v274 = vadd.f32 %v272, %v273
    %v275 = vld [vmem:[#allocation13] sm:$0xff]
    %v276 = vld [vmem:[#allocation13 + $0x8] sm:$0xff]
    %v277 = vld [vmem:[#allocation13 + $0x10] sm:$0xff]
    %v278 = vld [vmem:[#allocation13 + $0x18] sm:$0xff]
    %v279 = vld [vmem:[#allocation13 + $0x20] sm:$0xff]
    %v280 = vld [vmem:[#allocation13 + $0x28] sm:$0xff]
    %v281 = vld [vmem:[#allocation13 + $0x30] sm:$0xff]
    %v282 = vld [vmem:[#allocation13 + $0x38] sm:$0xff]
    %v283 = vld [vmem:[#allocation13 + $0x40] sm:$0xff]
    %v284 = vld [vmem:[#allocation13 + $0x48] sm:$0xff]
    %v285 = vld [vmem:[#allocation13 + $0x50] sm:$0xff]
    %v286 = vld [vmem:[#allocation13 + $0x58] sm:$0xff]
    %v287 = vld [vmem:[#allocation13 + $0x60] sm:$0xff]
    %v288 = vld [vmem:[#allocation13 + $0x68] sm:$0xff]
    %v289 = vld [vmem:[#allocation13 + $0x70] sm:$0xff]
    %v290 = vld [vmem:[#allocation13 + $0x78] sm:$0xff]
    %vm293 = vcmask 1041409
    %v294 = vsel %vm293, %v274, %v268
    %296 = vmatpush.msra.mxu0 %v290
    %297 = vmatpush.msra.mxu0 %v289
    %298 = vmatpush.msra.mxu0 %v288
    %299 = vmatpush.msra.mxu0 %v287
    %300 = vmatpush.msra.mxu0 %v286
    %301 = vmatpush.msra.mxu0 %v285
    %302 = vmatpush.msra.mxu0 %v284
    %303 = vmatpush.msra.mxu0 %v283
    %304 = vmatpush.msra.mxu0 %v282
    %305 = vmatpush.msra.mxu0 %v281
    %306 = vmatpush.msra.mxu0 %v280
    %307 = vmatpush.msra.mxu0 %v279
    %308 = vmatpush.msra.mxu0 %v278
    %309 = vmatpush.msra.mxu0 %v277
    %310 = vmatpush.msra.mxu0 %v276
    %311 = vmatpush.msra.mxu0 %v275
    %312 = vmatmul.f32.gmra.mxu0 %v294
    %v313 = vpop.f32.mrf.mxu0
    %v314 = vadd.f32 0.0, %v313
    %315 = vdwg.mxu0
    %316 = vst [vmem:[#allocation14] sm:$0x3] %v314
    // Predicated region
    $region62: #{tpu_custom_call.1} parent=1 // pred_check
      _
    $region63: #{tpu_custom_call.1} parent=1 // pred_check_branch
      %318 = sbr.rel (0) target = $region65
    $region64: #{tpu_custom_call.1} parent=1 // pred_region
      %320 = vsyncadd [#allocation4], 0
      %s322 = sshll.u32 [#allocation14], 4
      %s323 = int_to_ptr.vmem [resolvable:$true] %s322
      %s324 = sshll.u32 %s8, 4
      %s325 = int_to_ptr.hbm [resolvable:$true] %s324
      %327 = dma.vmem_to_hbm [thread:$0]  %s323, 32, %s325, [#allocation4]
    $region65: #{tpu_custom_call.1} parent=1 // pred_fallthru
      _
    // Predicated region
    $region66: #{tpu_custom_call.1} parent=1 // pred_check
      _
    $region67: #{tpu_custom_call.1} parent=1 // pred_check_branch
      %329 = sbr.rel (0) target = $region69
    $region68: #{tpu_custom_call.1} parent=1 // pred_region
      %331 = dma.done [#allocation4], 32
    $region69: #{tpu_custom_call.1} parent=1 // pred_fallthru
      _
    %332 = vsyncpa [#allocation3], 1
    %333 = vsyncpa [#allocation6], 1
    %334 = vsyncpa [#allocation9], 1
    %335 = vsyncpa [#allocation12], 1
    %336 = vsyncpa [#allocation4], 1

</llo_original>
